<compile_context>
chip_gen: v5e
topology: v5e:2x2
jax: 0.10.0
libtpu: 0.0.40
codegen_flags: <defaults>
</compile_context>

<pallas_src>
import functools

import jax
import jax.numpy as jnp
from jax.experimental import pallas as pl
from jax.experimental.pallas import tpu as pltpu


def _pick_kv_block(n):
    """KV block size for the online softmax; bounds score VMEM independent of N."""
    if n <= 512:
        return n
    for blk in (512, 256, 128):
        if n % blk == 0:
            return blk
    # TODO(synk): masked tail block for sequence lengths with no nice divisor.
    return n


def _pick_batch_tile(batch, seq, dim, kv_block,
                     vmem_budget_bytes=40 * 1024 * 1024):
    """Largest TB that (a) divides batch, (b) keeps the row dim sublane-aligned
    ((TB*N) % 8 == 0), (c) fits a rough per-step VMEM budget (sized so it is
    safe even under v7x's 64 MiB VMEM) and (d) leaves >= 2 grid steps so the
    token/output DMA pipelines and the 'parallel' axis can be core-sharded."""

    def footprint(tb):
        rows = tb * seq
        tokens = 2 * rows * dim * 2            # bf16 x, double-buffered
        out = 2 * rows * dim * 4               # f32 out, double-buffered
        qkv = rows * 3 * dim * 4               # f32 scratch
        o_all = rows * dim * 4                 # f32 scratch (head-output slab)
        scores = 3 * tb * seq * kv_block * 4   # s / p / rescale live per KV blk
        weights = 2 * (4 * dim * dim) * 2 + 2 * (4 * dim) * 4
        return tokens + out + qkv + o_all + scores + weights

    best = None
    for tb in range(1, batch + 1):
        if batch % tb:
            continue
        if (tb * seq) % 8:
            continue
        if footprint(tb) > vmem_budget_bytes:
            continue
        if batch // tb >= 2:
            best = tb                          # keep the largest such TB
    if best is not None:
        return best
    # Fallback: largest valid tile even if the grid degenerates to 1 step.
    for tb in range(batch, 0, -1):
        if batch % tb == 0 and (tb * seq) % 8 == 0 and \
                footprint(tb) <= vmem_budget_bytes:
            return tb
    return batch


def _mha_kernel(x_ref, wqkv_ref, bqkv_ref, wp_ref, bp_ref, out_ref,
                qkv_ref, oall_ref, *,
                num_heads, d_k, seq, dim, batch_tile, kv_block, scale):
    N, E, H, TB, KB = seq, dim, num_heads, batch_tile, kv_block
    num_kv = N // KB

    # ---- Fused QKV projection: one full-width MXU matmul, f32 accumulation,
    # written straight to VMEM scratch (not an SSA value carried across the
    # unrolled head loop).
    qkv_ref[...] = (jnp.dot(x_ref[...], wqkv_ref[...],
                            preferred_element_type=jnp.float32)
                    + bqkv_ref[...])                           # (TB*N, 3E) f32

    # ---- Per-head attention, batched over the TB batch rows. --------------
    # Only this head's q/k/v slices (and small m/l/acc running stats) are live
    # per iteration; head outputs go to the oall_ref scratch slab.
    for h in range(H):
        lo = h * d_k
        # Attention scale folded into Q once, before the bf16 cast.
        qh = (qkv_ref[:, lo:lo + d_k] * scale
              ).astype(jnp.bfloat16).reshape(TB, N, d_k)
        kh = qkv_ref[:, E + lo:E + lo + d_k
                     ].astype(jnp.bfloat16).reshape(TB, N, d_k)
        vh = qkv_ref[:, 2 * E + lo:2 * E + lo + d_k
                     ].astype(jnp.bfloat16).reshape(TB, N, d_k)

        # Flash-style online softmax over KV blocks: the live score tensor is
        # (TB, N, KB) f32, bounded independent of total N.
        m = jnp.full((TB, N, 1), -jnp.inf, jnp.float32)
        l = jnp.zeros((TB, N, 1), jnp.float32)
        acc = jnp.zeros((TB, N, d_k), jnp.float32)
        for kb in range(num_kv):
            ks = kh[:, kb * KB:(kb + 1) * KB, :]
            vs = vh[:, kb * KB:(kb + 1) * KB, :]
            # Scores: contraction on the last dim of both operands (no K^T).
            s = jnp.einsum("bqd,bkd->bqk", qh, ks,
                           preferred_element_type=jnp.float32)  # (TB,N,KB) f32
            m_new = jnp.maximum(m, jnp.max(s, axis=-1, keepdims=True))
            alpha = jnp.exp(m - m_new)
            p = jnp.exp(s - m_new)
            l = alpha * l + jnp.sum(p, axis=-1, keepdims=True)
            acc = alpha * acc + jnp.einsum(
                "bqk,bkd->bqd", p.astype(jnp.bfloat16), vs,
                preferred_element_type=jnp.float32)
            m = m_new

        # Normalize via the EUP reciprocal (approx -- flagged above) and drop
        # this head's output into its lane slab of the scratch.
        o = acc * pl.reciprocal(l, approx=True)
        oall_ref[:, lo:lo + d_k] = o.reshape(TB * N, d_k)

    # ---- ONE full-width output projection over the concatenated heads. ----
    y = jnp.dot(oall_ref[...].astype(jnp.bfloat16), wp_ref[...],
                preferred_element_type=jnp.float32) + bp_ref[...]
    out_ref[...] = y.astype(out_ref.dtype)


def multi_head_attention(x, params, *, num_heads, batch_tile=None,
                         kv_block=None):
    """x: (B, N, E) float32. params: torch-convention Linear weights/biases."""
    B, N, E = x.shape
    assert E % num_heads == 0
    d_k = E // num_heads
    scale = float(d_k) ** (-0.5)

    if kv_block is None:
        kv_block = _pick_kv_block(N)
    assert N % kv_block == 0

    if batch_tile is None:
        batch_tile = _pick_batch_tile(B, N, E, kv_block)
    assert B % batch_tile == 0
    TB = batch_tile
    if TB < B:
        # (8,128) rule: a partial block's row dim must be sublane-aligned.
        assert (TB * N) % 8 == 0, "batch_tile*N must be a multiple of 8"

    # Fuse the three projection weights into one (E, 3E) matrix.  Torch Linear
    # stores (out, in); the kernel computes x @ W^T, so transpose here.  bf16
    # storage halves weight DMA bytes and VMEM footprint.
    wqkv = jnp.concatenate(
        [params["wq"].T, params["wk"].T, params["wv"].T], axis=1
    ).astype(jnp.bfloat16)                                     # (E, 3E)
    bqkv = jnp.concatenate(
        [params["bq"], params["bk"], params["bv"]]
    ).reshape(1, 3 * E).astype(jnp.float32)
    wp = params["wp"].T.astype(jnp.bfloat16)                   # (E, E)
    bp = params["bp"].reshape(1, E).astype(jnp.float32)

    # Flatten (B, N, E) -> (B*N, E): tokens on sublanes, features on lanes.
    # bf16 token stream halves input HBM traffic (largest benefit on v5e).
    x_tok = x.reshape(B * N, E).astype(jnp.bfloat16)

    kernel = functools.partial(
        _mha_kernel, num_heads=num_heads, d_k=d_k, seq=N, dim=E,
        batch_tile=TB, kv_block=kv_block, scale=scale)

    H = num_heads
    cost = pl.CostEstimate(
        flops=2 * B * N * E * 3 * E          # QKV projection
              + 4 * B * N * N * E            # scores + PV over all heads
              + 2 * B * N * E * E,           # output projection
        transcendentals=B * H * N * N,       # exp in softmax
        bytes_accessed=B * N * E * (2 + 4) + 4 * E * E * 2 + 4 * E * 4,
    )

    out_tok = pl.pallas_call(
        kernel,
        out_shape=jax.ShapeDtypeStruct((B * N, E), x.dtype),
        grid_spec=pltpu.PrefetchScalarGridSpec(
            num_scalar_prefetch=0,
            grid=(B // TB,),
            in_specs=[
                pl.BlockSpec((TB * N, E), lambda b: (b, 0)),      # tokens
                pl.BlockSpec((E, 3 * E), lambda b: (0, 0)),       # W_qkv
                pl.BlockSpec((1, 3 * E), lambda b: (0, 0)),       # b_qkv
                pl.BlockSpec((E, E), lambda b: (0, 0)),           # W_proj
                pl.BlockSpec((1, E), lambda b: (0, 0)),           # b_proj
            ],
            out_specs=pl.BlockSpec((TB * N, E), lambda b: (b, 0)),
            scratch_shapes=[
                pltpu.VMEM((TB * N, 3 * E), jnp.float32),  # fused QKV acts
                pltpu.VMEM((TB * N, E), jnp.float32),      # head-output slab
            ],
        ),
        compiler_params=pltpu.CompilerParams(
            dimension_semantics=("parallel",),
            vmem_limit_bytes=48 * 1024 * 1024,
        ),
        cost_estimate=cost,
    )(x_tok, wqkv, bqkv, wp, bp)

    return out_tok.reshape(B, N, E)


def _reference(x, params, *, num_heads):
    """Pure-JAX float32 reference mirroring the PyTorch forward exactly."""
    B, N, E = x.shape
    d_k = E // num_heads
    scale = float(d_k) ** (-0.5)

    def lin(t, w, b):
        return jnp.einsum("bne,oe->bno", t, w) + b

    q = lin(x, params["wq"], params["bq"])
    k = lin(x, params["wk"], params["bk"])
    v = lin(x, params["wv"], params["bv"])

    def split(t):  # (B, N, E) -> (B, H, N, d_k)
        return t.reshape(B, N, num_heads, d_k).transpose(0, 2, 1, 3)

    q, k, v = split(q), split(k), split(v)
    s = jnp.einsum("bhqd,bhkd->bhqk", q, k) * scale
    p = jax.nn.softmax(s, axis=-1)
    o = jnp.einsum("bhqk,bhkd->bhqd", p, v)
    o = o.transpose(0, 2, 1, 3).reshape(B, N, E)
    return lin(o, params["wp"], params["bp"])


if __name__ == "__main__":
    B, N, E, H = 2, 8, 32, 4   # batch, num_patches, dim_embedding, num_heads

    key = jax.random.PRNGKey(0)
    keys = jax.random.split(key, 9)
    init = lambda k, shape: (jax.random.normal(k, shape, jnp.float32)
                             * (1.0 / jnp.sqrt(E)))
    params = {
        "wq": init(keys[0], (E, E)), "bq": init(keys[1], (E,)),
        "wk": init(keys[2], (E, E)), "bk": init(keys[3], (E,)),
        "wv": init(keys[4], (E, E)), "bv": init(keys[5], (E,)),
        "wp": init(keys[6], (E, E)), "bp": init(keys[7], (E,)),
    }
    x = jax.random.normal(keys[8], (B, N, E), jnp.float32)

    out = multi_head_attention(x, params, num_heads=H)
    out = jax.block_until_ready(out)

    ref = _reference(x, params, num_heads=H)
    assert out.shape == (B, N, E)
    # Tolerance accounts for bf16 MXU inputs/weights (f32 accumulation) and
    # the approximate EUP reciprocal; softmax math itself is f32.
    assert jnp.allclose(out, ref, atol=5e-2, rtol=5e-2), "mismatch vs reference"

    print("KERNEL_OK")
</pallas_src>

<mosaic_0001>
module attributes {stable_mosaic.version = 11 : i64} {
  func.func @_mha_kernel(%arg0: i32, %arg1: memref<8x32xbf16, #tpu.memory_space<vmem>>, %arg2: memref<32x96xbf16, #tpu.memory_space<vmem>>, %arg3: memref<1x96xf32, #tpu.memory_space<vmem>>, %arg4: memref<32x32xbf16, #tpu.memory_space<vmem>>, %arg5: memref<1x32xf32, #tpu.memory_space<vmem>>, %arg6: memref<8x32xf32, #tpu.memory_space<vmem>>, %arg7: memref<8x96xf32, #tpu.memory_space<vmem>>, %arg8: memref<8x32xf32, #tpu.memory_space<vmem>>) attributes {dimension_semantics = [#tpu.dimension_semantics<parallel>], iteration_bounds = array<i64: 2>, scalar_prefetch = 0 : i64, scratch_operands = 2 : i64, tpu.core_type = #tpu.core_type<tc>, window_params = [{transform_indices = @transform_0, window_bounds = array<i64: 8, 32>}, {pipeline_mode = #tpu.pipeline_mode<synchronous>, transform_indices = @transform_1, window_bounds = array<i64: 32, 96>}, {pipeline_mode = #tpu.pipeline_mode<synchronous>, transform_indices = @transform_2, window_bounds = array<i64: 1, 96>}, {pipeline_mode = #tpu.pipeline_mode<synchronous>, transform_indices = @transform_3, window_bounds = array<i64: 32, 32>}, {pipeline_mode = #tpu.pipeline_mode<synchronous>, transform_indices = @transform_4, window_bounds = array<i64: 1, 32>}, {transform_indices = @transform_5, window_bounds = array<i64: 8, 32>}]} {
    %c0 = arith.constant 0 : index
    %c0_0 = arith.constant 0 : index
    %0 = vector.load %arg1[%c0, %c0_0] : memref<8x32xbf16, #tpu.memory_space<vmem>>, vector<8x32xbf16>
    %c0_1 = arith.constant 0 : index
    %c0_2 = arith.constant 0 : index
    %1 = vector.load %arg2[%c0_1, %c0_2] : memref<32x96xbf16, #tpu.memory_space<vmem>>, vector<32x96xbf16>
    %cst = arith.constant dense<0.000000e+00> : vector<8x96xf32>
    %2 = tpu.matmul %0, %1, %cst {dimension_numbers = #tpu.dot_dimension_numbers<[1], [0], [0], [1], [0, 0, 1, 1], [], []>} : vector<8x32xbf16>, vector<32x96xbf16>, vector<8x96xf32> -> vector<8x96xf32>
    %c0_3 = arith.constant 0 : index
    %c0_4 = arith.constant 0 : index
    %3 = vector.load %arg3[%c0_3, %c0_4] : memref<1x96xf32, #tpu.memory_space<vmem>>, vector<1x96xf32>
    %4 = vector.broadcast %3 : vector<1x96xf32> to vector<8x96xf32>
    %5 = arith.addf %2, %4 : vector<8x96xf32>
    %c0_5 = arith.constant 0 : index
    %c0_6 = arith.constant 0 : index
    %6 = vector.load %arg7[%c0_5, %c0_6] : memref<8x96xf32, #tpu.memory_space<vmem>>, vector<8x96xf32>
    tpu.vector_store %arg7[%c0_5, %c0_6], %5 {strides = array<i32>} : memref<8x96xf32, #tpu.memory_space<vmem>>, vector<8x96xf32>,
    %c0_7 = arith.constant 0 : index
    %c0_8 = arith.constant 0 : index
    %7 = vector.load %arg7[%c0_7, %c0_8] : memref<8x96xf32, #tpu.memory_space<vmem>>, vector<8x8xf32>
    %cst_9 = arith.constant 0.353553385 : f32
    %8 = vector.broadcast %cst_9 : f32 to vector<8x8xf32>
    %9 = arith.mulf %7, %8 : vector<8x8xf32>
    %10 = arith.truncf %9 : vector<8x8xf32> to vector<8x8xbf16>
    %11 = vector.shape_cast %10 : vector<8x8xbf16> to vector<1x8x8xbf16>
    %c0_10 = arith.constant 0 : index
    %c32 = arith.constant 32 : index
    %12 = vector.load %arg7[%c0_10, %c32] : memref<8x96xf32, #tpu.memory_space<vmem>>, vector<8x8xf32>
    %13 = arith.truncf %12 : vector<8x8xf32> to vector<8x8xbf16>
    %14 = vector.shape_cast %13 : vector<8x8xbf16> to vector<1x8x8xbf16>
    %c0_11 = arith.constant 0 : index
    %c64 = arith.constant 64 : index
    %15 = vector.load %arg7[%c0_11, %c64] : memref<8x96xf32, #tpu.memory_space<vmem>>, vector<8x8xf32>
    %16 = arith.truncf %15 : vector<8x8xf32> to vector<8x8xbf16>
    %17 = vector.shape_cast %16 : vector<8x8xbf16> to vector<1x8x8xbf16>
    %cst_12 = arith.constant 0xFF800000 : f32
    %18 = vector.broadcast %cst_12 : f32 to vector<1x8x1xf32>
    %cst_13 = arith.constant 0.000000e+00 : f32
    %19 = vector.broadcast %cst_13 : f32 to vector<1x8x1xf32>
    %cst_14 = arith.constant 0.000000e+00 : f32
    %20 = vector.broadcast %cst_14 : f32 to vector<1x8x8xf32>
    "tpu.trace_start"() <{level = 10 : i32, message = "bqd,bkd->bqk"}> : () -> ()
    %cst_15 = arith.constant dense<0.000000e+00> : vector<1x8x8xf32>
    %21 = tpu.matmul %11, %14, %cst_15 {dimension_numbers = #tpu.dot_dimension_numbers<[2], [2], [1], [1], [0, 0, 0, 1, 1, 1], [0], [0]>} : vector<1x8x8xbf16>, vector<1x8x8xbf16>, vector<1x8x8xf32> -> vector<1x8x8xf32>
    "tpu.trace_stop"() : () -> ()
    %cst_16 = arith.constant dense<0xFF800000> : vector<1x8xf32>
    %22 = vector.multi_reduction <maximumf>, %21, %cst_16 [2] : vector<1x8x8xf32> to vector<1x8xf32>
    %23 = vector.shape_cast %22 : vector<1x8xf32> to vector<1x8x1xf32>
    %24 = arith.maximumf %18, %23 : vector<1x8x1xf32>
    %25 = arith.subf %18, %24 : vector<1x8x1xf32>
    %26 = math.exp %25 : vector<1x8x1xf32>
    %27 = vector.broadcast %24 : vector<1x8x1xf32> to vector<1x8x8xf32>
    %28 = arith.subf %21, %27 : vector<1x8x8xf32>
    %29 = math.exp %28 : vector<1x8x8xf32>
    %30 = arith.mulf %26, %19 : vector<1x8x1xf32>
    %cst_17 = arith.constant dense<0.000000e+00> : vector<1x8xf32>
    %31 = vector.multi_reduction <add>, %29, %cst_17 [2] : vector<1x8x8xf32> to vector<1x8xf32>
    %32 = vector.shape_cast %31 : vector<1x8xf32> to vector<1x8x1xf32>
    %33 = arith.addf %30, %32 : vector<1x8x1xf32>
    %34 = vector.broadcast %26 : vector<1x8x1xf32> to vector<1x8x8xf32>
    %35 = arith.mulf %34, %20 : vector<1x8x8xf32>
    %36 = arith.truncf %29 : vector<1x8x8xf32> to vector<1x8x8xbf16>
    "tpu.trace_start"() <{level = 10 : i32, message = "bqk,bkd->bqd"}> : () -> ()
    %cst_18 = arith.constant dense<0.000000e+00> : vector<1x8x8xf32>
    %37 = tpu.matmul %36, %17, %cst_18 {dimension_numbers = #tpu.dot_dimension_numbers<[2], [1], [1], [2], [0, 0, 0, 1, 1, 2], [0], [0]>} : vector<1x8x8xbf16>, vector<1x8x8xbf16>, vector<1x8x8xf32> -> vector<1x8x8xf32>
    "tpu.trace_stop"() : () -> ()
    %38 = arith.addf %35, %37 : vector<1x8x8xf32>
    %39 = tpu.reciprocal %33 {approx = true} : vector<1x8x1xf32> -> vector<1x8x1xf32>
    %40 = vector.broadcast %39 : vector<1x8x1xf32> to vector<1x8x8xf32>
    %41 = arith.mulf %38, %40 : vector<1x8x8xf32>
    %42 = vector.shape_cast %41 : vector<1x8x8xf32> to vector<8x8xf32>
    %c0_19 = arith.constant 0 : index
    %c0_20 = arith.constant 0 : index
    %43 = vector.load %arg8[%c0_19, %c0_20] : memref<8x32xf32, #tpu.memory_space<vmem>>, vector<8x8xf32>
    tpu.vector_store %arg8[%c0_19, %c0_20], %42 {strides = array<i32>} : memref<8x32xf32, #tpu.memory_space<vmem>>, vector<8x8xf32>,
    %c0_21 = arith.constant 0 : index
    %c8 = arith.constant 8 : index
    %44 = vector.load %arg7[%c0_21, %c8] : memref<8x96xf32, #tpu.memory_space<vmem>>, vector<8x8xf32>
    %cst_22 = arith.constant 0.353553385 : f32
    %45 = vector.broadcast %cst_22 : f32 to vector<8x8xf32>
    %46 = arith.mulf %44, %45 : vector<8x8xf32>
    %47 = arith.truncf %46 : vector<8x8xf32> to vector<8x8xbf16>
    %48 = vector.shape_cast %47 : vector<8x8xbf16> to vector<1x8x8xbf16>
    %c0_23 = arith.constant 0 : index
    %c40 = arith.constant 40 : index
    %49 = vector.load %arg7[%c0_23, %c40] : memref<8x96xf32, #tpu.memory_space<vmem>>, vector<8x8xf32>
    %50 = arith.truncf %49 : vector<8x8xf32> to vector<8x8xbf16>
    %51 = vector.shape_cast %50 : vector<8x8xbf16> to vector<1x8x8xbf16>
    %c0_24 = arith.constant 0 : index
    %c72 = arith.constant 72 : index
    %52 = vector.load %arg7[%c0_24, %c72] : memref<8x96xf32, #tpu.memory_space<vmem>>, vector<8x8xf32>
    %53 = arith.truncf %52 : vector<8x8xf32> to vector<8x8xbf16>
    %54 = vector.shape_cast %53 : vector<8x8xbf16> to vector<1x8x8xbf16>
    %cst_25 = arith.constant 0xFF800000 : f32
    %55 = vector.broadcast %cst_25 : f32 to vector<1x8x1xf32>
    %cst_26 = arith.constant 0.000000e+00 : f32
    %56 = vector.broadcast %cst_26 : f32 to vector<1x8x1xf32>
    %cst_27 = arith.constant 0.000000e+00 : f32
    %57 = vector.broadcast %cst_27 : f32 to vector<1x8x8xf32>
    "tpu.trace_start"() <{level = 10 : i32, message = "bqd,bkd->bqk"}> : () -> ()
    %cst_28 = arith.constant dense<0.000000e+00> : vector<1x8x8xf32>
    %58 = tpu.matmul %48, %51, %cst_28 {dimension_numbers = #tpu.dot_dimension_numbers<[2], [2], [1], [1], [0, 0, 0, 1, 1, 1], [0], [0]>} : vector<1x8x8xbf16>, vector<1x8x8xbf16>, vector<1x8x8xf32> -> vector<1x8x8xf32>
    "tpu.trace_stop"() : () -> ()
    %cst_29 = arith.constant dense<0xFF800000> : vector<1x8xf32>
    %59 = vector.multi_reduction <maximumf>, %58, %cst_29 [2] : vector<1x8x8xf32> to vector<1x8xf32>
    %60 = vector.shape_cast %59 : vector<1x8xf32> to vector<1x8x1xf32>
    %61 = arith.maximumf %55, %60 : vector<1x8x1xf32>
    %62 = arith.subf %55, %61 : vector<1x8x1xf32>
    %63 = math.exp %62 : vector<1x8x1xf32>
    %64 = vector.broadcast %61 : vector<1x8x1xf32> to vector<1x8x8xf32>
    %65 = arith.subf %58, %64 : vector<1x8x8xf32>
    %66 = math.exp %65 : vector<1x8x8xf32>
    %67 = arith.mulf %63, %56 : vector<1x8x1xf32>
    %cst_30 = arith.constant dense<0.000000e+00> : vector<1x8xf32>
    %68 = vector.multi_reduction <add>, %66, %cst_30 [2] : vector<1x8x8xf32> to vector<1x8xf32>
    %69 = vector.shape_cast %68 : vector<1x8xf32> to vector<1x8x1xf32>
    %70 = arith.addf %67, %69 : vector<1x8x1xf32>
    %71 = vector.broadcast %63 : vector<1x8x1xf32> to vector<1x8x8xf32>
    %72 = arith.mulf %71, %57 : vector<1x8x8xf32>
    %73 = arith.truncf %66 : vector<1x8x8xf32> to vector<1x8x8xbf16>
    "tpu.trace_start"() <{level = 10 : i32, message = "bqk,bkd->bqd"}> : () -> ()
    %cst_31 = arith.constant dense<0.000000e+00> : vector<1x8x8xf32>
    %74 = tpu.matmul %73, %54, %cst_31 {dimension_numbers = #tpu.dot_dimension_numbers<[2], [1], [1], [2], [0, 0, 0, 1, 1, 2], [0], [0]>} : vector<1x8x8xbf16>, vector<1x8x8xbf16>, vector<1x8x8xf32> -> vector<1x8x8xf32>
    "tpu.trace_stop"() : () -> ()
    %75 = arith.addf %72, %74 : vector<1x8x8xf32>
    %76 = tpu.reciprocal %70 {approx = true} : vector<1x8x1xf32> -> vector<1x8x1xf32>
    %77 = vector.broadcast %76 : vector<1x8x1xf32> to vector<1x8x8xf32>
    %78 = arith.mulf %75, %77 : vector<1x8x8xf32>
    %79 = vector.shape_cast %78 : vector<1x8x8xf32> to vector<8x8xf32>
    %c0_32 = arith.constant 0 : index
    %c8_33 = arith.constant 8 : index
    %80 = vector.load %arg8[%c0_32, %c8_33] : memref<8x32xf32, #tpu.memory_space<vmem>>, vector<8x8xf32>
    tpu.vector_store %arg8[%c0_32, %c8_33], %79 {strides = array<i32>} : memref<8x32xf32, #tpu.memory_space<vmem>>, vector<8x8xf32>,
    %c0_34 = arith.constant 0 : index
    %c16 = arith.constant 16 : index
    %81 = vector.load %arg7[%c0_34, %c16] : memref<8x96xf32, #tpu.memory_space<vmem>>, vector<8x8xf32>
    %cst_35 = arith.constant 0.353553385 : f32
    %82 = vector.broadcast %cst_35 : f32 to vector<8x8xf32>
    %83 = arith.mulf %81, %82 : vector<8x8xf32>
    %84 = arith.truncf %83 : vector<8x8xf32> to vector<8x8xbf16>
    %85 = vector.shape_cast %84 : vector<8x8xbf16> to vector<1x8x8xbf16>
    %c0_36 = arith.constant 0 : index
    %c48 = arith.constant 48 : index
    %86 = vector.load %arg7[%c0_36, %c48] : memref<8x96xf32, #tpu.memory_space<vmem>>, vector<8x8xf32>
    %87 = arith.truncf %86 : vector<8x8xf32> to vector<8x8xbf16>
    %88 = vector.shape_cast %87 : vector<8x8xbf16> to vector<1x8x8xbf16>
    %c0_37 = arith.constant 0 : index
    %c80 = arith.constant 80 : index
    %89 = vector.load %arg7[%c0_37, %c80] : memref<8x96xf32, #tpu.memory_space<vmem>>, vector<8x8xf32>
    %90 = arith.truncf %89 : vector<8x8xf32> to vector<8x8xbf16>
    %91 = vector.shape_cast %90 : vector<8x8xbf16> to vector<1x8x8xbf16>
    %cst_38 = arith.constant 0xFF800000 : f32
    %92 = vector.broadcast %cst_38 : f32 to vector<1x8x1xf32>
    %cst_39 = arith.constant 0.000000e+00 : f32
    %93 = vector.broadcast %cst_39 : f32 to vector<1x8x1xf32>
    %cst_40 = arith.constant 0.000000e+00 : f32
    %94 = vector.broadcast %cst_40 : f32 to vector<1x8x8xf32>
    "tpu.trace_start"() <{level = 10 : i32, message = "bqd,bkd->bqk"}> : () -> ()
    %cst_41 = arith.constant dense<0.000000e+00> : vector<1x8x8xf32>
    %95 = tpu.matmul %85, %88, %cst_41 {dimension_numbers = #tpu.dot_dimension_numbers<[2], [2], [1], [1], [0, 0, 0, 1, 1, 1], [0], [0]>} : vector<1x8x8xbf16>, vector<1x8x8xbf16>, vector<1x8x8xf32> -> vector<1x8x8xf32>
    "tpu.trace_stop"() : () -> ()
    %cst_42 = arith.constant dense<0xFF800000> : vector<1x8xf32>
    %96 = vector.multi_reduction <maximumf>, %95, %cst_42 [2] : vector<1x8x8xf32> to vector<1x8xf32>
    %97 = vector.shape_cast %96 : vector<1x8xf32> to vector<1x8x1xf32>
    %98 = arith.maximumf %92, %97 : vector<1x8x1xf32>
    %99 = arith.subf %92, %98 : vector<1x8x1xf32>
    %100 = math.exp %99 : vector<1x8x1xf32>
    %101 = vector.broadcast %98 : vector<1x8x1xf32> to vector<1x8x8xf32>
    %102 = arith.subf %95, %101 : vector<1x8x8xf32>
    %103 = math.exp %102 : vector<1x8x8xf32>
    %104 = arith.mulf %100, %93 : vector<1x8x1xf32>
    %cst_43 = arith.constant dense<0.000000e+00> : vector<1x8xf32>
    %105 = vector.multi_reduction <add>, %103, %cst_43 [2] : vector<1x8x8xf32> to vector<1x8xf32>
    %106 = vector.shape_cast %105 : vector<1x8xf32> to vector<1x8x1xf32>
    %107 = arith.addf %104, %106 : vector<1x8x1xf32>
    %108 = vector.broadcast %100 : vector<1x8x1xf32> to vector<1x8x8xf32>
    %109 = arith.mulf %108, %94 : vector<1x8x8xf32>
    %110 = arith.truncf %103 : vector<1x8x8xf32> to vector<1x8x8xbf16>
    "tpu.trace_start"() <{level = 10 : i32, message = "bqk,bkd->bqd"}> : () -> ()
    %cst_44 = arith.constant dense<0.000000e+00> : vector<1x8x8xf32>
    %111 = tpu.matmul %110, %91, %cst_44 {dimension_numbers = #tpu.dot_dimension_numbers<[2], [1], [1], [2], [0, 0, 0, 1, 1, 2], [0], [0]>} : vector<1x8x8xbf16>, vector<1x8x8xbf16>, vector<1x8x8xf32> -> vector<1x8x8xf32>
    "tpu.trace_stop"() : () -> ()
    %112 = arith.addf %109, %111 : vector<1x8x8xf32>
    %113 = tpu.reciprocal %107 {approx = true} : vector<1x8x1xf32> -> vector<1x8x1xf32>
    %114 = vector.broadcast %113 : vector<1x8x1xf32> to vector<1x8x8xf32>
    %115 = arith.mulf %112, %114 : vector<1x8x8xf32>
    %116 = vector.shape_cast %115 : vector<1x8x8xf32> to vector<8x8xf32>
    %c0_45 = arith.constant 0 : index
    %c16_46 = arith.constant 16 : index
    %117 = vector.load %arg8[%c0_45, %c16_46] : memref<8x32xf32, #tpu.memory_space<vmem>>, vector<8x8xf32>
    tpu.vector_store %arg8[%c0_45, %c16_46], %116 {strides = array<i32>} : memref<8x32xf32, #tpu.memory_space<vmem>>, vector<8x8xf32>,
    %c0_47 = arith.constant 0 : index
    %c24 = arith.constant 24 : index
    %118 = vector.load %arg7[%c0_47, %c24] : memref<8x96xf32, #tpu.memory_space<vmem>>, vector<8x8xf32>
    %cst_48 = arith.constant 0.353553385 : f32
    %119 = vector.broadcast %cst_48 : f32 to vector<8x8xf32>
    %120 = arith.mulf %118, %119 : vector<8x8xf32>
    %121 = arith.truncf %120 : vector<8x8xf32> to vector<8x8xbf16>
    %122 = vector.shape_cast %121 : vector<8x8xbf16> to vector<1x8x8xbf16>
    %c0_49 = arith.constant 0 : index
    %c56 = arith.constant 56 : index
    %123 = vector.load %arg7[%c0_49, %c56] : memref<8x96xf32, #tpu.memory_space<vmem>>, vector<8x8xf32>
    %124 = arith.truncf %123 : vector<8x8xf32> to vector<8x8xbf16>
    %125 = vector.shape_cast %124 : vector<8x8xbf16> to vector<1x8x8xbf16>
    %c0_50 = arith.constant 0 : index
    %c88 = arith.constant 88 : index
    %126 = vector.load %arg7[%c0_50, %c88] : memref<8x96xf32, #tpu.memory_space<vmem>>, vector<8x8xf32>
    %127 = arith.truncf %126 : vector<8x8xf32> to vector<8x8xbf16>
    %128 = vector.shape_cast %127 : vector<8x8xbf16> to vector<1x8x8xbf16>
    %cst_51 = arith.constant 0xFF800000 : f32
    %129 = vector.broadcast %cst_51 : f32 to vector<1x8x1xf32>
    %cst_52 = arith.constant 0.000000e+00 : f32
    %130 = vector.broadcast %cst_52 : f32 to vector<1x8x1xf32>
    %cst_53 = arith.constant 0.000000e+00 : f32
    %131 = vector.broadcast %cst_53 : f32 to vector<1x8x8xf32>
    "tpu.trace_start"() <{level = 10 : i32, message = "bqd,bkd->bqk"}> : () -> ()
    %cst_54 = arith.constant dense<0.000000e+00> : vector<1x8x8xf32>
    %132 = tpu.matmul %122, %125, %cst_54 {dimension_numbers = #tpu.dot_dimension_numbers<[2], [2], [1], [1], [0, 0, 0, 1, 1, 1], [0], [0]>} : vector<1x8x8xbf16>, vector<1x8x8xbf16>, vector<1x8x8xf32> -> vector<1x8x8xf32>
    "tpu.trace_stop"() : () -> ()
    %cst_55 = arith.constant dense<0xFF800000> : vector<1x8xf32>
    %133 = vector.multi_reduction <maximumf>, %132, %cst_55 [2] : vector<1x8x8xf32> to vector<1x8xf32>
    %134 = vector.shape_cast %133 : vector<1x8xf32> to vector<1x8x1xf32>
    %135 = arith.maximumf %129, %134 : vector<1x8x1xf32>
    %136 = arith.subf %129, %135 : vector<1x8x1xf32>
    %137 = math.exp %136 : vector<1x8x1xf32>
    %138 = vector.broadcast %135 : vector<1x8x1xf32> to vector<1x8x8xf32>
    %139 = arith.subf %132, %138 : vector<1x8x8xf32>
    %140 = math.exp %139 : vector<1x8x8xf32>
    %141 = arith.mulf %137, %130 : vector<1x8x1xf32>
    %cst_56 = arith.constant dense<0.000000e+00> : vector<1x8xf32>
    %142 = vector.multi_reduction <add>, %140, %cst_56 [2] : vector<1x8x8xf32> to vector<1x8xf32>
    %143 = vector.shape_cast %142 : vector<1x8xf32> to vector<1x8x1xf32>
    %144 = arith.addf %141, %143 : vector<1x8x1xf32>
    %145 = vector.broadcast %137 : vector<1x8x1xf32> to vector<1x8x8xf32>
    %146 = arith.mulf %145, %131 : vector<1x8x8xf32>
    %147 = arith.truncf %140 : vector<1x8x8xf32> to vector<1x8x8xbf16>
    "tpu.trace_start"() <{level = 10 : i32, message = "bqk,bkd->bqd"}> : () -> ()
    %cst_57 = arith.constant dense<0.000000e+00> : vector<1x8x8xf32>
    %148 = tpu.matmul %147, %128, %cst_57 {dimension_numbers = #tpu.dot_dimension_numbers<[2], [1], [1], [2], [0, 0, 0, 1, 1, 2], [0], [0]>} : vector<1x8x8xbf16>, vector<1x8x8xbf16>, vector<1x8x8xf32> -> vector<1x8x8xf32>
    "tpu.trace_stop"() : () -> ()
    %149 = arith.addf %146, %148 : vector<1x8x8xf32>
    %150 = tpu.reciprocal %144 {approx = true} : vector<1x8x1xf32> -> vector<1x8x1xf32>
    %151 = vector.broadcast %150 : vector<1x8x1xf32> to vector<1x8x8xf32>
    %152 = arith.mulf %149, %151 : vector<1x8x8xf32>
    %153 = vector.shape_cast %152 : vector<1x8x8xf32> to vector<8x8xf32>
    %c0_58 = arith.constant 0 : index
    %c24_59 = arith.constant 24 : index
    %154 = vector.load %arg8[%c0_58, %c24_59] : memref<8x32xf32, #tpu.memory_space<vmem>>, vector<8x8xf32>
    tpu.vector_store %arg8[%c0_58, %c24_59], %153 {strides = array<i32>} : memref<8x32xf32, #tpu.memory_space<vmem>>, vector<8x8xf32>,
    %c0_60 = arith.constant 0 : index
    %c0_61 = arith.constant 0 : index
    %155 = vector.load %arg8[%c0_60, %c0_61] : memref<8x32xf32, #tpu.memory_space<vmem>>, vector<8x32xf32>
    %156 = arith.truncf %155 : vector<8x32xf32> to vector<8x32xbf16>
    %c0_62 = arith.constant 0 : index
    %c0_63 = arith.constant 0 : index
    %157 = vector.load %arg4[%c0_62, %c0_63] : memref<32x32xbf16, #tpu.memory_space<vmem>>, vector<32x32xbf16>
    %cst_64 = arith.constant dense<0.000000e+00> : vector<8x32xf32>
    %158 = tpu.matmul %156, %157, %cst_64 {dimension_numbers = #tpu.dot_dimension_numbers<[1], [0], [0], [1], [0, 0, 1, 1], [], []>} : vector<8x32xbf16>, vector<32x32xbf16>, vector<8x32xf32> -> vector<8x32xf32>
    %c0_65 = arith.constant 0 : index
    %c0_66 = arith.constant 0 : index
    %159 = vector.load %arg5[%c0_65, %c0_66] : memref<1x32xf32, #tpu.memory_space<vmem>>, vector<1x32xf32>
    %160 = vector.broadcast %159 : vector<1x32xf32> to vector<8x32xf32>
    %161 = arith.addf %158, %160 : vector<8x32xf32>
    %c0_67 = arith.constant 0 : index
    %c0_68 = arith.constant 0 : index
    %162 = vector.load %arg6[%c0_67, %c0_68] : memref<8x32xf32, #tpu.memory_space<vmem>>, vector<8x32xf32>
    tpu.vector_store %arg6[%c0_67, %c0_68], %161 {strides = array<i32>} : memref<8x32xf32, #tpu.memory_space<vmem>>, vector<8x32xf32>,
    return
  }
  func.func @transform_0(%arg0: i32) -> (i32, i32) {
    %c0_i32 = arith.constant 0 : i32
    %c0_i32_0 = arith.constant 0 : i32
    return %arg0, %c0_i32 : i32, i32
  }
  func.func @transform_1(%arg0: i32) -> (i32, i32) {
    %c0_i32 = arith.constant 0 : i32
    %c0_i32_0 = arith.constant 0 : i32
    %c0_i32_1 = arith.constant 0 : i32
    return %c0_i32, %c0_i32_0 : i32, i32
  }
  func.func @transform_2(%arg0: i32) -> (i32, i32) {
    %c0_i32 = arith.constant 0 : i32
    %c0_i32_0 = arith.constant 0 : i32
    %c0_i32_1 = arith.constant 0 : i32
    return %c0_i32, %c0_i32_0 : i32, i32
  }
  func.func @transform_3(%arg0: i32) -> (i32, i32) {
    %c0_i32 = arith.constant 0 : i32
    %c0_i32_0 = arith.constant 0 : i32
    %c0_i32_1 = arith.constant 0 : i32
    return %c0_i32, %c0_i32_0 : i32, i32
  }
  func.func @transform_4(%arg0: i32) -> (i32, i32) {
    %c0_i32 = arith.constant 0 : i32
    %c0_i32_0 = arith.constant 0 : i32
    %c0_i32_1 = arith.constant 0 : i32
    return %c0_i32, %c0_i32_0 : i32, i32
  }
  func.func @transform_5(%arg0: i32) -> (i32, i32) {
    %c0_i32 = arith.constant 0 : i32
    %c0_i32_0 = arith.constant 0 : i32
    return %arg0, %c0_i32 : i32, i32
  }
}

</mosaic_0001>

<llo_original>
// kernel: tpu_custom_call.1
$region0: #{tpu_custom_call.1}
  #allocation0 [shape = 'u32[]', space=smem, size = 0x4, offset = 0x4, fixed_abs, tag = 'smem constant byte address 0x4 - core index']
  #allocation1 [shape = 'u32[72,128]{1,0:T(1,128)}', space=vmem, size = 0x9000, scoped, tag = 'internal scratch']
  #allocation2 [shape = 'f32[8,96]{1,0:T(8,128)}', space=vmem, size = 0x1000, scoped, tag = 'scratch operand']
  #allocation3 [shape = 'f32[8,32]{1,0:T(8,128)}', space=vmem, size = 0x1000, scoped, tag = 'scratch operand']
  %s0 = inlined_call_operand.hbm [shape: bf16[16,32], index: 0, kind: input, shape index: {}]
  %s1 = inlined_call_operand.hbm [shape: bf16[32,96], index: 1, kind: input, shape index: {}]
  %s2 = inlined_call_operand.vmem [shape: f32[1,96], index: 2, kind: input, shape index: {}]
  %s3 = inlined_call_operand.hbm [shape: bf16[32,32], index: 3, kind: input, shape index: {}]
  %s4 = inlined_call_operand.vmem [shape: f32[1,32], index: 4, kind: input, shape index: {}]
  %s5 = inlined_call_operand.hbm [shape: f32[16,32], index: 5, kind: output, shape index: {}]
  %s6 = sld [smem:[#allocation0]]
  $region65: #{tpu_custom_call.1} parent=0
    _
  %s8 = ssub.s32 1, %s6
  %s9 = scalar_select 0, %s8, %s6
  $region1: #{tpu_custom_call.1} parent=0
    #allocation4 [shape = 'u8[4096]{0}', space=vmem, size = 0x1000, scoped, tag = 'input window, operand 0']
    #allocation5 [shape = 's32[2]{0}', space=sflag, size = 0x8, scoped, tag = 'scoped memory for tpu_custom_call.1']
    #allocation6 [shape = 's32[2]{0}', space=sflag, size = 0x8, scoped, tag = 'scoped memory for tpu_custom_call.1']
    #allocation7 [shape = 'u8[8192]{0}', space=vmem, size = 0x2000, scoped, tag = 'input window, operand 1, single buffered']
    #allocation8 [shape = 's32[1]{0}', space=sflag, size = 0x4, scoped, tag = 'scoped memory for tpu_custom_call.1']
    #allocation9 [shape = 'u8[8192]{0}', space=vmem, size = 0x2000, scoped, tag = 'input window, operand 3, single buffered']
    #allocation10 [shape = 'u8[8192]{0}', space=vmem, size = 0x2000, scoped, tag = 'output window, operand 0']
    %10 = vsyncpa [#allocation5], 0
    %s11 = scalar_lea.sflag [#allocation5], 1
    %12 = vsyncpa %s11, 0
    %13 = vsyncpa [#allocation8], 0
    %14 = vsyncpa [#allocation6], 0
    %s15 = scalar_lea.sflag [#allocation6], 1
    %16 = vsyncpa %s15, 0
    loop: start=0, step=1, limit=4
    $region2: #{tpu_custom_call.1} parent=1 // loop_pre_header
      _
    $region3: #{tpu_custom_call.1} parent=1 // loop_header
      %s18 = sphi 0, %s22
      %p19 = scmp.ge.s32.totalorder %s18, 4
      %s28 = sphi 0, %s30
      %s31 = sphi 0, %s28
      %s32 = sphi 0, %s31
      %s48 = sphi 0, %s32
      %s52 = sphi 0, %s52
      %s54 = sphi 0, %s52
      %s55 = sphi 0, %s54
      %s69 = sphi 0, %s55
      %s73 = sphi 0, %s73
      %s75 = sphi 0, %s73
      %s76 = sphi 0, %s75
      %s90 = sphi 0, %s76
      %s94 = sphi 0, %s94
      %s96 = sphi 0, %s94
      %s97 = sphi 0, %s96
      %s111 = sphi 0, %s97
      %s115 = sphi 0, %s115
      %s117 = sphi 0, %s115
      %s118 = sphi 0, %s117
      %s132 = sphi 0, %s118
      %s138 = sphi 0, %s140
      %s141 = sphi 0, %s138
      %s142 = sphi 0, %s141
      %s158 = sphi 0, %s142
    $region4: #{tpu_custom_call.1} parent=1 // loop_header_branch
      %21 = sbr.rel (%p19) target = $region8
    $region5: #{tpu_custom_call.1} parent=1 // loop_body
      %s23 = ssub.s32 %s18, 1
      %s24 = ssub.s32 %s18, 2
      %s25 = sadd.s32 %s18, 1
      %s26 = ssub.s32 %s18, %s25
      %p27 = scmp.eq.s32.totalorder %s26, 0
      %s29 = sadd.s32 %s28, 1
      %s30 = scalar_select %p27, %s28, %s29
      %p33 = pneg %p27
      %p34 = scmp.eq.s32.totalorder %s18, 1
      %p35 = por %p33, %p34
      %p36 = scmp.ne.s32.totalorder %s28, %s31
      %p37 = scmp.eq.s32.totalorder %s18, 0
      %p38 = por %p36, %p37
      %p39 = scmp.ne.s32.totalorder %s28, %s31
      %p40 = scmp.eq.s32.totalorder %s23, 1
      %p41 = por %p39, %p40
      %p42 = scmp.ne.s32.totalorder %s31, %s32
      %p43 = scmp.eq.s32.totalorder %s23, 0
      %p44 = por %p42, %p43
      %p45 = scmp.ne.s32.totalorder %s31, %s32
      %p46 = scmp.eq.s32.totalorder %s24, 1
      %p47 = por %p45, %p46
      %p49 = scmp.ne.s32.totalorder %s32, %s48
      %p50 = scmp.eq.s32.totalorder %s24, 0
      %p51 = por %p49, %p50
      %s53 = sadd.s32 %s52, 1
      %p56 = scmp.eq.s32.totalorder %s18, 1
      %p57 = scmp.ne.s32.totalorder %s52, %s54
      %p58 = scmp.eq.s32.totalorder %s18, 0
      %p59 = por %p57, %p58
      %p60 = scmp.ne.s32.totalorder %s52, %s54
      %p61 = scmp.eq.s32.totalorder %s23, 1
      %p62 = por %p60, %p61
      %p63 = scmp.ne.s32.totalorder %s54, %s55
      %p64 = scmp.eq.s32.totalorder %s23, 0
      %p65 = por %p63, %p64
      %p66 = scmp.ne.s32.totalorder %s54, %s55
      %p67 = scmp.eq.s32.totalorder %s24, 1
      %p68 = por %p66, %p67
      %p70 = scmp.ne.s32.totalorder %s55, %s69
      %p71 = scmp.eq.s32.totalorder %s24, 0
      %p72 = por %p70, %p71
      %s74 = sadd.s32 %s73, 1
      %p77 = scmp.eq.s32.totalorder %s18, 1
      %p78 = scmp.ne.s32.totalorder %s73, %s75
      %p79 = scmp.eq.s32.totalorder %s18, 0
      %p80 = por %p78, %p79
      %p81 = scmp.ne.s32.totalorder %s73, %s75
      %p82 = scmp.eq.s32.totalorder %s23, 1
      %p83 = por %p81, %p82
      %p84 = scmp.ne.s32.totalorder %s75, %s76
      %p85 = scmp.eq.s32.totalorder %s23, 0
      %p86 = por %p84, %p85
      %p87 = scmp.ne.s32.totalorder %s75, %s76
      %p88 = scmp.eq.s32.totalorder %s24, 1
      %p89 = por %p87, %p88
      %p91 = scmp.ne.s32.totalorder %s76, %s90
      %p92 = scmp.eq.s32.totalorder %s24, 0
      %p93 = por %p91, %p92
      %s95 = sadd.s32 %s94, 1
      %p98 = scmp.eq.s32.totalorder %s18, 1
      %p99 = scmp.ne.s32.totalorder %s94, %s96
      %p100 = scmp.eq.s32.totalorder %s18, 0
      %p101 = por %p99, %p100
      %p102 = scmp.ne.s32.totalorder %s94, %s96
      %p103 = scmp.eq.s32.totalorder %s23, 1
      %p104 = por %p102, %p103
      %p105 = scmp.ne.s32.totalorder %s96, %s97
      %p106 = scmp.eq.s32.totalorder %s23, 0
      %p107 = por %p105, %p106
      %p108 = scmp.ne.s32.totalorder %s96, %s97
      %p109 = scmp.eq.s32.totalorder %s24, 1
      %p110 = por %p108, %p109
      %p112 = scmp.ne.s32.totalorder %s97, %s111
      %p113 = scmp.eq.s32.totalorder %s24, 0
      %p114 = por %p112, %p113
      %s116 = sadd.s32 %s115, 1
      %p119 = scmp.eq.s32.totalorder %s18, 1
      %p120 = scmp.ne.s32.totalorder %s115, %s117
      %p121 = scmp.eq.s32.totalorder %s18, 0
      %p122 = por %p120, %p121
      %p123 = scmp.ne.s32.totalorder %s115, %s117
      %p124 = scmp.eq.s32.totalorder %s23, 1
      %p125 = por %p123, %p124
      %p126 = scmp.ne.s32.totalorder %s117, %s118
      %p127 = scmp.eq.s32.totalorder %s23, 0
      %p128 = por %p126, %p127
      %p129 = scmp.ne.s32.totalorder %s117, %s118
      %p130 = scmp.eq.s32.totalorder %s24, 1
      %p131 = por %p129, %p130
      %p133 = scmp.ne.s32.totalorder %s118, %s132
      %p134 = scmp.eq.s32.totalorder %s24, 0
      %p135 = por %p133, %p134
      %s136 = ssub.s32 %s18, %s25
      %p137 = scmp.eq.s32.totalorder %s136, 0
      %s139 = sadd.s32 %s138, 1
      %s140 = scalar_select %p137, %s138, %s139
      %p143 = pneg %p137
      %p144 = scmp.eq.s32.totalorder %s18, 1
      %p145 = por %p143, %p144
      %p146 = scmp.ne.s32.totalorder %s138, %s141
      %p147 = scmp.eq.s32.totalorder %s18, 0
      %p148 = por %p146, %p147
      %p149 = scmp.ne.s32.totalorder %s138, %s141
      %p150 = scmp.eq.s32.totalorder %s23, 1
      %p151 = por %p149, %p150
      %p152 = scmp.ne.s32.totalorder %s141, %s142
      %p153 = scmp.eq.s32.totalorder %s23, 0
      %p154 = por %p152, %p153
      %p155 = scmp.ne.s32.totalorder %s141, %s142
      %p156 = scmp.eq.s32.totalorder %s24, 1
      %p157 = por %p155, %p156
      %p159 = scmp.ne.s32.totalorder %s142, %s158
      %p160 = scmp.eq.s32.totalorder %s24, 0
      %p161 = por %p159, %p160
      %p162 = scmp.le.s32.totalorder 1, %s18
      %p163 = scmp.lt.s32.totalorder %s18, 3
      %p164 = pnand %p162, %p163
      %p165 = pneg %p164
      // Predicated region
      $region9: #{tpu_custom_call.1} parent=5 // pred_check
        _
      $region10: #{tpu_custom_call.1} parent=5 // pred_check_branch
        %167 = sbr.rel (%p164) target = $region12
      $region11: #{tpu_custom_call.1} parent=5 // pred_region
        %s168 = ssub.s32 %s18, 1
        // Predicated region
        $region13: #{tpu_custom_call.1} parent=11 // pred_check
          %p169 = pneg %p65
        $region14: #{tpu_custom_call.1} parent=11 // pred_check_branch
          %171 = sbr.rel (%p169) target = $region16
        $region15: #{tpu_custom_call.1} parent=11 // pred_region
          %173 = vsyncadd [#allocation8], 0
          %s174 = sshll.u32 %s1, 4
          %s175 = int_to_ptr.hbm [resolvable:$true] %s174
          %s176 = sshll.u32 [#allocation7], 4
          %s177 = int_to_ptr.vmem [resolvable:$true] %s176
          %182 = dma.hbm_to_vmem [thread:$0]  %s175, 256, %s177, [#allocation8], 64, 64, 4
        $region16: #{tpu_custom_call.1} parent=11 // pred_fallthru
          _
        // Predicated region
        $region17: #{tpu_custom_call.1} parent=11 // pred_check
          %p183 = pneg %p86
        $region18: #{tpu_custom_call.1} parent=11 // pred_check_branch
          %185 = sbr.rel (%p183) target = $region20
        $region19: #{tpu_custom_call.1} parent=11 // pred_region
          _
        $region20: #{tpu_custom_call.1} parent=11 // pred_fallthru
          _
        // Predicated region
        $region21: #{tpu_custom_call.1} parent=11 // pred_check
          %p186 = pneg %p107
        $region22: #{tpu_custom_call.1} parent=11 // pred_check_branch
          %188 = sbr.rel (%p186) target = $region24
        $region23: #{tpu_custom_call.1} parent=11 // pred_region
          %190 = vsyncadd [#allocation8], 0
          %s191 = sshll.u32 %s3, 4
          %s192 = int_to_ptr.hbm [resolvable:$true] %s191
          %s193 = sshll.u32 [#allocation9], 4
          %s194 = int_to_ptr.vmem [resolvable:$true] %s193
          %199 = dma.hbm_to_vmem [thread:$0]  %s192, 256, %s194, [#allocation8], 64, 64, 4
        $region24: #{tpu_custom_call.1} parent=11 // pred_fallthru
          _
        // Predicated region
        $region25: #{tpu_custom_call.1} parent=11 // pred_check
          %p200 = pneg %p128
        $region26: #{tpu_custom_call.1} parent=11 // pred_check_branch
          %202 = sbr.rel (%p200) target = $region28
        $region27: #{tpu_custom_call.1} parent=11 // pred_region
          _
        $region28: #{tpu_custom_call.1} parent=11 // pred_fallthru
          _
      $region12: #{tpu_custom_call.1} parent=5 // pred_fallthru
        _
      %p203 = scmp.lt.s32.totalorder %s18, 2
      // Predicated region
      $region29: #{tpu_custom_call.1} parent=5 // pred_check
        %p204 = pneg %p203
      $region30: #{tpu_custom_call.1} parent=5 // pred_check_branch
        %206 = sbr.rel (%p204) target = $region32
      $region31: #{tpu_custom_call.1} parent=5 // pred_region
        // Predicated region
        $region33: #{tpu_custom_call.1} parent=31 // pred_check
          %p207 = pneg %p38
        $region34: #{tpu_custom_call.1} parent=31 // pred_check_branch
          %209 = sbr.rel (%p207) target = $region36
        $region35: #{tpu_custom_call.1} parent=31 // pred_region
          %s210 = sand.u32 %s28, 1
          %s211 = scalar_lea.sflag [#allocation5], %s210
          %s212 = sand.u32 %s28, 1
          %s213 = smul.addr %s212, 4
          %s214 = scalar_lea.vmem [#allocation4], %s213
          %216 = vsyncadd %s211, 0
          %s217 = smul.addr %s18, 4
          %s218 = scalar_lea.hbm %s0, %s217
          %s220 = sshll.u32 %s218, 4
          %s221 = int_to_ptr.hbm [resolvable:$true] %s220
          %s222 = sshll.u32 %s214, 4
          %s223 = int_to_ptr.vmem [resolvable:$true] %s222
          %225 = dma.hbm_to_vmem [thread:$0]  %s221, 64, %s223, %s211
        $region36: #{tpu_custom_call.1} parent=31 // pred_fallthru
          _
      $region32: #{tpu_custom_call.1} parent=5 // pred_fallthru
        _
      %p226 = scmp.le.s32.totalorder 1, %s18
      %p227 = scmp.lt.s32.totalorder %s18, 3
      %p228 = pnand %p226, %p227
      %p229 = pneg %p228
      // Predicated region
      $region37: #{tpu_custom_call.1} parent=5 // pred_check
        _
      $region38: #{tpu_custom_call.1} parent=5 // pred_check_branch
        %231 = sbr.rel (%p228) target = $region40
      $region39: #{tpu_custom_call.1} parent=5 // pred_region
        %s232 = ssub.s32 %s18, 1
        %s233 = sand.u32 %s31, 1
        %s234 = scalar_lea.sflag [#allocation5], %s233
        %s235 = sand.u32 %s31, 1
        %s236 = smul.addr %s235, 4
        %s237 = scalar_lea.vmem [#allocation4], %s236
        // Predicated region
        $region41: #{tpu_custom_call.1} parent=39 // pred_check
          %p238 = pneg %p44
        $region42: #{tpu_custom_call.1} parent=39 // pred_check_branch
          %240 = sbr.rel (%p238) target = $region44
        $region43: #{tpu_custom_call.1} parent=39 // pred_region
          %242 = dma.done %s234, 64
        $region44: #{tpu_custom_call.1} parent=39 // pred_fallthru
          _
        // Predicated region
        $region45: #{tpu_custom_call.1} parent=39 // pred_check
          %p243 = pneg %p65
        $region46: #{tpu_custom_call.1} parent=39 // pred_check_branch
          %245 = sbr.rel (%p243) target = $region48
        $region47: #{tpu_custom_call.1} parent=39 // pred_region
          %247 = dma.done [#allocation8], 256
        $region48: #{tpu_custom_call.1} parent=39 // pred_fallthru
          _
        // Predicated region
        $region49: #{tpu_custom_call.1} parent=39 // pred_check
          %p248 = pneg %p107
        $region50: #{tpu_custom_call.1} parent=39 // pred_check_branch
          %250 = sbr.rel (%p248) target = $region52
        $region51: #{tpu_custom_call.1} parent=39 // pred_region
          %252 = dma.done [#allocation8], 256
        $region52: #{tpu_custom_call.1} parent=39 // pred_fallthru
          _
        %s253 = sand.u32 %s31, 1
        %s254 = scalar_lea.sflag [#allocation5], %s253
        %s255 = sand.u32 %s31, 1
        %s256 = smul.addr %s255, 4
        %s257 = scalar_lea.vmem [#allocation4], %s256
        %p258 = pneg %p44
        %p259 = pneg %p41
        %p260 = pneg %p65
        %p261 = pneg %p62
        %p262 = pneg %p86
        %p263 = pneg %p83
        %p264 = pneg %p107
        %p265 = pneg %p104
        %p266 = pneg %p128
        %p267 = pneg %p125
        %p268 = pneg %p154
        %p269 = pneg %p151
        %s270 = sand.u32 %s141, 1
        %s271 = scalar_lea.sflag [#allocation6], %s270
        %s272 = sand.u32 %s141, 1
        %s273 = smul.addr %s272, 8
        %s274 = scalar_lea.vmem [#allocation10], %s273
        %v276 = vld [vmem:[%s237] sm:$0xf]
        %v277 = vld [vmem:[#allocation7] sm:$0xf]
        %v278 = vld [vmem:[#allocation7 + $0x4] sm:$0xf]
        %v279 = vld [vmem:[#allocation7 + $0x8] sm:$0xf]
        %v280 = vld [vmem:[#allocation7 + $0xc] sm:$0xf]
        %v281 = vld [vmem:[%s2] sm:$0x1]
        %v283 = vperm.slane %v281, 0
        %v289 = vunpack.c.l.b16 %v277
        %v290 = vunpack.c.l.b16 %v278
        %v291 = vunpack.c.l.b16 %v279
        %v292 = vunpack.c.l.b16 %v280
        %v293 = vpack.c.b16 %v290, %v289
        %v294 = vpack.c.b16 %v292, %v291
        %vm297 = vcmask 261120
        %v299 = vsel %vm297, %v276, 0
        %301 = vmatpush.bf16.msra.mxu0 0
        %302 = vmatpush.bf16.msra.mxu0 0
        %303 = vmatpush.bf16.msra.mxu0 0
        %304 = vmatpush.bf16.msra.mxu0 0
        %305 = vmatpush.bf16.msra.mxu0 0
        %306 = vmatpush.bf16.msra.mxu0 0
        %307 = vmatpush.bf16.msra.mxu0 %v294
        %308 = vmatpush.bf16.msra.mxu0 %v293
        %309 = vmatmul.bf16.gmra.mxu0 %v299
        %v310 = vpop.f32.mrf.mxu0
        %v311 = vadd.f32 %v283, %v310
        %v312 = vpop.f32.mrf.mxu0
        %313 = vdwg.mxu0
        %vm314 = vcmask 785408
        %315 = vst.msk [vmem:[#allocation2] sm:$0xff] %vm314, %v311
        %v316 = vld [vmem:[#allocation2] sm:$0xff]
        %v317 = vmul.f32 %v316, 0.35355338
        %v318 = vpack.c.bf16 %v317, %v317
        %v319 = vpack.c.bf16 %v316, %v316
        %v321 = vunpack.c.l.b16 %v319
        %v322 = vpack.c.b16 %v321, %v321
        %323 = vrot.lane.b32.xlu0 %v322, 96
        %v324 = vpop.permute.xlu0 %323
        %vm325 = vcmask 64512
        %v327 = vsel %vm325, %v318, 0
        %v330 = vsel %vm325, %v324, 0
        %332 = vmatpush.bf16.xpose.msra.mxu0 0
        %333 = vmatpush.bf16.xpose.msra.mxu0 0
        %334 = vmatpush.bf16.xpose.msra.mxu0 0
        %335 = vmatpush.bf16.xpose.msra.mxu0 0
        %336 = vmatpush.bf16.xpose.msra.mxu0 0
        %337 = vmatpush.bf16.xpose.msra.mxu0 0
        %338 = vmatpush.bf16.xpose.msra.mxu0 0
        %339 = vmatpush.bf16.xpose.msra.mxu0 %v330
        %340 = vmatmul.bf16.gmra.mxu0 %v327
        %v341 = vpop.f32.mrf.mxu0
        %v342 = vadd.f32 0.0, %v341
        %v343 = vpop.f32.mrf.mxu0
        %344 = vdwg.mxu0
        %v345 = vsel %vm325, %v342, -inf
        %346 = vmax.xlane.f32.xlu0 %v345
        %v347 = vpop.xlane.xlu0 %346
        %v348 = vsub.f32 -inf, %v347
        %v349 = vmul.f32 %v348, 1.442695
        %v350 = vpow.pop %v349
        %v351 = vsub.f32 %v342, %v347
        %v352 = vmul.f32 %v351, 1.442695
        %v353 = vpow.pop %v352
        %v354 = vmul.f32 %v350, 0.0
        %v355 = vsel %vm325, %v353, 0.0
        %356 = vadd.xlane.f32.xlu0 %v355
        %v357 = vpop.xlane.xlu0 %356
        %v358 = vadd.f32 %v354, %v357
        %v359 = vpack.c.bf16 %v353, %v353
        %360 = vrot.lane.b32.xlu0 %v322, 64
        %v361 = vpop.permute.xlu0 %360
        %v363 = vsel %vm325, %v359, 0
        %vm365 = vcmask 1043456
        %v367 = vsel %vm365, %v361, 0
        %369 = vmatpush.bf16.msra.mxu0 0
        %370 = vmatpush.bf16.msra.mxu0 0
        %371 = vmatpush.bf16.msra.mxu0 0
        %372 = vmatpush.bf16.msra.mxu0 0
        %373 = vmatpush.bf16.msra.mxu0 0
        %374 = vmatpush.bf16.msra.mxu0 0
        %375 = vmatpush.bf16.msra.mxu0 0
        %376 = vmatpush.bf16.msra.mxu0 %v367
        %377 = vmatmul.bf16.gmra.mxu0 %v363
        %v378 = vpop.f32.mrf.mxu0
        %v379 = vadd.f32 0.0, %v378
        %v380 = vpop.f32.mrf.mxu0
        %381 = vdwg.mxu0
        %v382 = vadd.f32 %v354, %v379
        %v383 = vrcp.pop %v358
        %v384 = vmul.f32 %v382, %v383
        %385 = vst.msk [vmem:[#allocation3] sm:$0xff] %vm325, %v384
        %v386 = vld [vmem:[#allocation2] sm:$0xff]
        %v387 = vmul.f32 %v386, 0.35355338
        %v388 = vpack.c.bf16 %v387, %v387
        %v389 = vpack.c.bf16 %v386, %v386
        %v391 = vunpack.c.l.b16 %v388
        %v392 = vpack.c.b16 %v391, %v391
        %393 = vrot.lane.b32.xlu0 %v392, 120
        %v394 = vpop.permute.xlu0 %393
        %v396 = vunpack.c.l.b16 %v389
        %v397 = vpack.c.b16 %v396, %v396
        %398 = vrot.lane.b32.xlu0 %v397, 88
        %v399 = vpop.permute.xlu0 %398
        %v401 = vsel %vm325, %v394, 0
        %v404 = vsel %vm325, %v399, 0
        %406 = vmatpush.bf16.xpose.msra.mxu0 0
        %407 = vmatpush.bf16.xpose.msra.mxu0 0
        %408 = vmatpush.bf16.xpose.msra.mxu0 0
        %409 = vmatpush.bf16.xpose.msra.mxu0 0
        %410 = vmatpush.bf16.xpose.msra.mxu0 0
        %411 = vmatpush.bf16.xpose.msra.mxu0 0
        %412 = vmatpush.bf16.xpose.msra.mxu0 0
        %413 = vmatpush.bf16.xpose.msra.mxu0 %v404
        %414 = vmatmul.bf16.gmra.mxu0 %v401
        %v415 = vpop.f32.mrf.mxu0
        %v416 = vadd.f32 0.0, %v415
        %v417 = vpop.f32.mrf.mxu0
        %418 = vdwg.mxu0
        %v419 = vsel %vm325, %v416, -inf
        %420 = vmax.xlane.f32.xlu0 %v419
        %v421 = vpop.xlane.xlu0 %420
        %v422 = vsub.f32 -inf, %v421
        %v423 = vmul.f32 %v422, 1.442695
        %v424 = vpow.pop %v423
        %v425 = vsub.f32 %v416, %v421
        %v426 = vmul.f32 %v425, 1.442695
        %v427 = vpow.pop %v426
        %v428 = vmul.f32 %v424, 0.0
        %v429 = vsel %vm325, %v427, 0.0
        %430 = vadd.xlane.f32.xlu0 %v429
        %v431 = vpop.xlane.xlu0 %430
        %v432 = vadd.f32 %v428, %v431
        %v433 = vpack.c.bf16 %v427, %v427
        %434 = vrot.lane.b32.xlu0 %v397, 56
        %v435 = vpop.permute.xlu0 %434
        %v437 = vsel %vm325, %v433, 0
        %v440 = vsel %vm365, %v435, 0
        %442 = vmatpush.bf16.msra.mxu0 0
        %443 = vmatpush.bf16.msra.mxu0 0
        %444 = vmatpush.bf16.msra.mxu0 0
        %445 = vmatpush.bf16.msra.mxu0 0
        %446 = vmatpush.bf16.msra.mxu0 0
        %447 = vmatpush.bf16.msra.mxu0 0
        %448 = vmatpush.bf16.msra.mxu0 0
        %449 = vmatpush.bf16.msra.mxu0 %v440
        %450 = vmatmul.bf16.gmra.mxu0 %v437
        %v451 = vpop.f32.mrf.mxu0
        %v452 = vadd.f32 0.0, %v451
        %v453 = vpop.f32.mrf.mxu0
        %454 = vdwg.mxu0
        %v455 = vadd.f32 %v428, %v452
        %v456 = vrcp.pop %v432
        %v457 = vmul.f32 %v455, %v456
        %459 = vrot.lane.b32.xlu0 %v457, 8
        %v460 = vpop.permute.xlu0 %459
        %vm462 = vcmask 130112
        %463 = vst.msk [vmem:[#allocation3] sm:$0xff] %vm462, %v460
        %v464 = vld [vmem:[#allocation2] sm:$0xff]
        %v465 = vmul.f32 %v464, 0.35355338
        %v466 = vpack.c.bf16 %v465, %v465
        %v467 = vpack.c.bf16 %v464, %v464
        %v469 = vunpack.c.l.b16 %v466
        %v470 = vpack.c.b16 %v469, %v469
        %471 = vrot.lane.b32.xlu0 %v470, 112
        %v472 = vpop.permute.xlu0 %471
        %v474 = vunpack.c.l.b16 %v467
        %v475 = vpack.c.b16 %v474, %v474
        %476 = vrot.lane.b32.xlu0 %v475, 80
        %v477 = vpop.permute.xlu0 %476
        %v479 = vsel %vm325, %v472, 0
        %v482 = vsel %vm325, %v477, 0
        %484 = vmatpush.bf16.xpose.msra.mxu0 0
        %485 = vmatpush.bf16.xpose.msra.mxu0 0
        %486 = vmatpush.bf16.xpose.msra.mxu0 0
        %487 = vmatpush.bf16.xpose.msra.mxu0 0
        %488 = vmatpush.bf16.xpose.msra.mxu0 0
        %489 = vmatpush.bf16.xpose.msra.mxu0 0
        %490 = vmatpush.bf16.xpose.msra.mxu0 0
        %491 = vmatpush.bf16.xpose.msra.mxu0 %v482
        %492 = vmatmul.bf16.gmra.mxu0 %v479
        %v493 = vpop.f32.mrf.mxu0
        %v494 = vadd.f32 0.0, %v493
        %v495 = vpop.f32.mrf.mxu0
        %496 = vdwg.mxu0
        %v497 = vsel %vm325, %v494, -inf
        %498 = vmax.xlane.f32.xlu0 %v497
        %v499 = vpop.xlane.xlu0 %498
        %v500 = vsub.f32 -inf, %v499
        %v501 = vmul.f32 %v500, 1.442695
        %v502 = vpow.pop %v501
        %v503 = vsub.f32 %v494, %v499
        %v504 = vmul.f32 %v503, 1.442695
        %v505 = vpow.pop %v504
        %v506 = vmul.f32 %v502, 0.0
        %v507 = vsel %vm325, %v505, 0.0
        %508 = vadd.xlane.f32.xlu0 %v507
        %v509 = vpop.xlane.xlu0 %508
        %v510 = vadd.f32 %v506, %v509
        %v511 = vpack.c.bf16 %v505, %v505
        %512 = vrot.lane.b32.xlu0 %v475, 48
        %v513 = vpop.permute.xlu0 %512
        %v515 = vsel %vm325, %v511, 0
        %v518 = vsel %vm365, %v513, 0
        %520 = vmatpush.bf16.msra.mxu0 0
        %521 = vmatpush.bf16.msra.mxu0 0
        %522 = vmatpush.bf16.msra.mxu0 0
        %523 = vmatpush.bf16.msra.mxu0 0
        %524 = vmatpush.bf16.msra.mxu0 0
        %525 = vmatpush.bf16.msra.mxu0 0
        %526 = vmatpush.bf16.msra.mxu0 0
        %527 = vmatpush.bf16.msra.mxu0 %v518
        %528 = vmatmul.bf16.gmra.mxu0 %v515
        %v529 = vpop.f32.mrf.mxu0
        %v530 = vadd.f32 0.0, %v529
        %v531 = vpop.f32.mrf.mxu0
        %532 = vdwg.mxu0
        %v533 = vadd.f32 %v506, %v530
        %v534 = vrcp.pop %v510
        %v535 = vmul.f32 %v533, %v534
        %537 = vrot.lane.b32.xlu0 %v535, 16
        %v538 = vpop.permute.xlu0 %537
        %vm540 = vcmask 195712
        %541 = vst.msk [vmem:[#allocation3] sm:$0xff] %vm540, %v538
        %v542 = vld [vmem:[#allocation2] sm:$0xff]
        %v543 = vmul.f32 %v542, 0.35355338
        %v544 = vpack.c.bf16 %v543, %v543
        %v545 = vpack.c.bf16 %v542, %v542
        %v547 = vunpack.c.l.b16 %v544
        %v548 = vpack.c.b16 %v547, %v547
        %549 = vrot.lane.b32.xlu0 %v548, 104
        %v550 = vpop.permute.xlu0 %549
        %v552 = vunpack.c.l.b16 %v545
        %v553 = vpack.c.b16 %v552, %v552
        %554 = vrot.lane.b32.xlu0 %v553, 72
        %v555 = vpop.permute.xlu0 %554
        %v557 = vsel %vm325, %v550, 0
        %v560 = vsel %vm325, %v555, 0
        %562 = vmatpush.bf16.xpose.msra.mxu0 0
        %563 = vmatpush.bf16.xpose.msra.mxu0 0
        %564 = vmatpush.bf16.xpose.msra.mxu0 0
        %565 = vmatpush.bf16.xpose.msra.mxu0 0
        %566 = vmatpush.bf16.xpose.msra.mxu0 0
        %567 = vmatpush.bf16.xpose.msra.mxu0 0
        %568 = vmatpush.bf16.xpose.msra.mxu0 0
        %569 = vmatpush.bf16.xpose.msra.mxu0 %v560
        %570 = vmatmul.bf16.gmra.mxu0 %v557
        %v571 = vpop.f32.mrf.mxu0
        %v572 = vadd.f32 0.0, %v571
        %v573 = vpop.f32.mrf.mxu0
        %574 = vdwg.mxu0
        %v575 = vsel %vm325, %v572, -inf
        %576 = vmax.xlane.f32.xlu0 %v575
        %v577 = vpop.xlane.xlu0 %576
        %v578 = vsub.f32 -inf, %v577
        %v579 = vmul.f32 %v578, 1.442695
        %v580 = vpow.pop %v579
        %v581 = vsub.f32 %v572, %v577
        %v582 = vmul.f32 %v581, 1.442695
        %v583 = vpow.pop %v582
        %v584 = vmul.f32 %v580, 0.0
        %v585 = vsel %vm325, %v583, 0.0
        %586 = vadd.xlane.f32.xlu0 %v585
        %v587 = vpop.xlane.xlu0 %586
        %v588 = vadd.f32 %v584, %v587
        %v589 = vpack.c.bf16 %v583, %v583
        %590 = vrot.lane.b32.xlu0 %v553, 40
        %v591 = vpop.permute.xlu0 %590
        %v593 = vsel %vm325, %v589, 0
        %v596 = vsel %vm365, %v591, 0
        %598 = vmatpush.bf16.msra.mxu0 0
        %599 = vmatpush.bf16.msra.mxu0 0
        %600 = vmatpush.bf16.msra.mxu0 0
        %601 = vmatpush.bf16.msra.mxu0 0
        %602 = vmatpush.bf16.msra.mxu0 0
        %603 = vmatpush.bf16.msra.mxu0 0
        %604 = vmatpush.bf16.msra.mxu0 0
        %605 = vmatpush.bf16.msra.mxu0 %v596
        %606 = vmatmul.bf16.gmra.mxu0 %v593
        %v607 = vpop.f32.mrf.mxu0
        %v608 = vadd.f32 0.0, %v607
        %v609 = vpop.f32.mrf.mxu0
        %610 = vdwg.mxu0
        %v611 = vadd.f32 %v584, %v608
        %v612 = vrcp.pop %v588
        %v613 = vmul.f32 %v611, %v612
        %615 = vrot.lane.b32.xlu0 %v613, 24
        %v616 = vpop.permute.xlu0 %615
        %vm618 = vcmask 261312
        %619 = vst.msk [vmem:[#allocation3] sm:$0xff] %vm618, %v616
        %v620 = vld [vmem:[#allocation3] sm:$0xff]
        %v621 = vpack.c.bf16 %v620, %v620
        %v622 = vld [vmem:[#allocation9] sm:$0xf]
        %v623 = vld [vmem:[#allocation9 + $0x4] sm:$0xf]
        %v624 = vld [vmem:[#allocation9 + $0x8] sm:$0xf]
        %v625 = vld [vmem:[#allocation9 + $0xc] sm:$0xf]
        %v626 = vld [vmem:[%s4] sm:$0x1]
        %v628 = vperm.slane %v626, 0
        %v634 = vunpack.c.l.b16 %v622
        %v635 = vunpack.c.l.b16 %v623
        %v636 = vunpack.c.l.b16 %v624
        %v637 = vunpack.c.l.b16 %v625
        %v638 = vpack.c.b16 %v635, %v634
        %v639 = vpack.c.b16 %v637, %v636
        %v643 = vsel %vm297, %v621, 0
        %645 = vmatpush.bf16.msra.mxu0 0
        %646 = vmatpush.bf16.msra.mxu0 0
        %647 = vmatpush.bf16.msra.mxu0 0
        %648 = vmatpush.bf16.msra.mxu0 0
        %649 = vmatpush.bf16.msra.mxu0 0
        %650 = vmatpush.bf16.msra.mxu0 0
        %651 = vmatpush.bf16.msra.mxu0 %v639
        %652 = vmatpush.bf16.msra.mxu0 %v638
        %653 = vmatmul.bf16.gmra.mxu0 %v643
        %v654 = vpop.f32.mrf.mxu0
        %v655 = vadd.f32 %v628, %v654
        %v656 = vpop.f32.mrf.mxu0
        %657 = vdwg.mxu0
        %658 = vst.msk [vmem:[%s274] sm:$0xff] %vm297, %v655
        %s659 = sand.u32 %s141, 1
        %s660 = scalar_lea.sflag [#allocation6], %s659
        %s661 = sand.u32 %s141, 1
        %s662 = smul.addr %s661, 8
        %s663 = scalar_lea.vmem [#allocation10], %s662
        // Predicated region
        $region53: #{tpu_custom_call.1} parent=39 // pred_check
          %p664 = pneg %p151
        $region54: #{tpu_custom_call.1} parent=39 // pred_check_branch
          %666 = sbr.rel (%p664) target = $region56
        $region55: #{tpu_custom_call.1} parent=39 // pred_region
          %668 = vsyncadd %s660, 0
          %s669 = smul.addr %s23, 8
          %s670 = scalar_lea.hbm %s5, %s669
          %s672 = sshll.u32 %s663, 4
          %s673 = int_to_ptr.vmem [resolvable:$true] %s672
          %s674 = sshll.u32 %s670, 4
          %s675 = int_to_ptr.hbm [resolvable:$true] %s674
          %677 = dma.vmem_to_hbm [thread:$0]  %s673, 128, %s675, %s660
        $region56: #{tpu_custom_call.1} parent=39 // pred_fallthru
          _
      $region40: #{tpu_custom_call.1} parent=5 // pred_fallthru
        _
      %p678 = scmp.le.s32.totalorder 2, %s18
      // Predicated region
      $region57: #{tpu_custom_call.1} parent=5 // pred_check
        %p679 = pneg %p678
      $region58: #{tpu_custom_call.1} parent=5 // pred_check_branch
        %681 = sbr.rel (%p679) target = $region60
      $region59: #{tpu_custom_call.1} parent=5 // pred_region
        %s682 = ssub.s32 %s18, 2
        // Predicated region
        $region61: #{tpu_custom_call.1} parent=59 // pred_check
          %p683 = pneg %p157
        $region62: #{tpu_custom_call.1} parent=59 // pred_check_branch
          %685 = sbr.rel (%p683) target = $region64
        $region63: #{tpu_custom_call.1} parent=59 // pred_region
          %s686 = sand.u32 %s142, 1
          %s687 = scalar_lea.sflag [#allocation6], %s686
          %s688 = sand.u32 %s142, 1
          %s689 = smul.addr %s688, 8
          %s690 = scalar_lea.vmem [#allocation10], %s689
          %692 = dma.done %s687, 128
        $region64: #{tpu_custom_call.1} parent=59 // pred_fallthru
          _
      $region60: #{tpu_custom_call.1} parent=5 // pred_fallthru
        _
    $region6: #{tpu_custom_call.1} parent=1 // loop_footer
      %s22 = sadd.s32 1, %s18
    $region7: #{tpu_custom_call.1} parent=1 // loop_footer_branch
      %17 = sbr.rel target = $region3
    $region8: #{tpu_custom_call.1} parent=1 // loop_exit
      _
    %693 = vsyncpa [#allocation5], 1
    %s694 = scalar_lea.sflag [#allocation5], 1
    %695 = vsyncpa %s694, 1
    %696 = vsyncpa [#allocation8], 1
    %697 = vsyncpa [#allocation6], 1
    %s698 = scalar_lea.sflag [#allocation6], 1
    %699 = vsyncpa %s698, 1

</llo_original>
